<compile_context>
chip_gen: v7x
topology: tpu7x:2x2x1
jax: 0.10.0
libtpu: 0.0.40
codegen_flags: <defaults>
</compile_context>

<pallas_src>
import math
import numpy as np
import jax
import jax.numpy as jnp
from jax.experimental import pallas as pl
from jax.experimental.pallas import tpu as pltpu

OUT_PAD = 128  # lane-dense padded width for the fc_3 output store


def _make_kernel(B, N, F, G, E):
    R = B * N

    def kernel(state_ref, tau_ref, hx_ref,
               wphi_ref, bphi_ref,
               w1_ref, b1_ref,
               wih_ref, whh_ref, bih_ref, bhh_ref,
               w2_ref, b2_ref,
               w3_ref, b3_ref,
               out_ref, ghx_ref):
        f32 = jnp.float32

        # quantile embedding: cos(tau * pi * k), k = 0..E-1 (pi-row built in-register)
        k_row = jax.lax.broadcasted_iota(jnp.int32, (R, E), 1).astype(f32) * np.pi
        cos_tau = jnp.cos(tau_ref[...] * k_row)                                   # (R, E)
        phi = jnp.dot(cos_tau, wphi_ref[...], preferred_element_type=f32) + bphi_ref[...]
        phi = jnp.maximum(phi, 0.0)                                               # (R, G)

        # tile state rows across quantiles in-register: (B, F) -> (R, F)
        if B == 1:
            state_tile = jnp.broadcast_to(state_ref[...], (R, F))
        else:
            state_tile = jnp.broadcast_to(
                state_ref[...][:, None, :], (B, N, F)).reshape(R, F)

        # fc_1 + relu
        x = jnp.dot(state_tile, w1_ref[...], preferred_element_type=f32) + b1_ref[...]
        x = jnp.maximum(x, 0.0)                                                   # (R, H1)

        # GRUCell: 6 gate matmuls fused into 2 wide ones (PyTorch gate order r, z, n)
        h = hx_ref[...]
        gi = jnp.dot(x, wih_ref[...], preferred_element_type=f32) + bih_ref[...]  # (R, 3G)
        gh = jnp.dot(h, whh_ref[...], preferred_element_type=f32) + bhh_ref[...]  # (R, 3G)
        r = jax.nn.sigmoid(gi[:, 0:G] + gh[:, 0:G])
        z = jax.nn.sigmoid(gi[:, G:2 * G] + gh[:, G:2 * G])
        n = jnp.tanh(gi[:, 2 * G:3 * G] + r * gh[:, 2 * G:3 * G])
        ghx = (1.0 - z) * n + z * h                                               # (R, G)
        ghx_ref[...] = ghx

        # dropout(p=0.2) is identity in eval/inference mode
        # TODO(synk): training-mode dropout RNG is not reproduced (no clean torch-RNG equivalent).
        y = ghx + jnp.maximum(
            jnp.dot(ghx, w2_ref[...], preferred_element_type=f32) + b2_ref[...], 0.0)

        # fc_3 with weights zero-padded to OUT_PAD columns -> unmasked full-lane store
        out_ref[...] = jnp.dot(y * phi, w3_ref[...], preferred_element_type=f32) + b3_ref[...]

    return kernel


def iqn_forward(params, state, hx, tau, num_quantiles):
    """Mirrors AutoregressiveRecurrentIQN_v2.forward(state, hx, tau, num_quantiles)."""
    B, F = state.shape
    R = B * num_quantiles
    G = hx.shape[1]
    E = params["w_phi"].shape[0]
    H1 = params["w1"].shape[1]
    P = params["w3p"].shape[1]
    assert hx.shape == (R, G) and tau.shape == (R, 1)

    kernel = _make_kernel(B, num_quantiles, F, G, E)
    vmem = pl.BlockSpec(memory_space=pltpu.MemorySpace.VMEM)

    inputs = (state.astype(jnp.float32), tau.astype(jnp.float32), hx.astype(jnp.float32),
              params["w_phi"], params["b_phi"],
              params["w1"], params["b1"],
              params["w_ih"], params["w_hh"], params["b_ih"], params["b_hh"],
              params["w2"], params["b2"],
              params["w3p"], params["b3p"])

    flops = 2 * R * (E * G + F * H1 + H1 * 3 * G + G * 3 * G + G * G + G * P)
    transcendentals = R * (E + 3 * G)            # cos + 2*sigmoid + tanh (approx)
    bytes_accessed = 4 * (sum(int(a.size) for a in inputs) + R * P + R * G)

    out_pad, ghx = pl.pallas_call(
        kernel,
        out_shape=(jax.ShapeDtypeStruct((R, P), jnp.float32),
                   jax.ShapeDtypeStruct((R, G), jnp.float32)),
        in_specs=[vmem] * len(inputs),
        out_specs=(vmem, vmem),
        cost_estimate=pl.CostEstimate(flops=flops,
                                      transcendentals=transcendentals,
                                      bytes_accessed=bytes_accessed),
    )(*inputs)

    # torch: x.view(-1, N, F).transpose(1, 2) -> (B, F, N); drop the lane padding first
    z = out_pad[:, :F].reshape(B, num_quantiles, F).transpose(0, 2, 1)
    return z, ghx


def init_params(key, feature_len, gru_size, quantile_embedding_dim, fc1_units, out_pad=OUT_PAD):
    F, G, E, H1 = feature_len, gru_size, quantile_embedding_dim, fc1_units
    keys = jax.random.split(key, 12)

    def xavier(k, fan_in, fan_out):
        bound = math.sqrt(6.0 / (fan_in + fan_out))
        return jax.random.uniform(k, (fan_in, fan_out), jnp.float32, -bound, bound)

    def unif(k, shape, bound):
        return jax.random.uniform(k, shape, jnp.float32, -bound, bound)

    gb = 1.0 / math.sqrt(G)
    w3 = xavier(keys[4], G, F)
    b3 = unif(keys[5], (1, F), gb)
    return dict(
        # nn.Linear weights get xavier_uniform_, biases keep default uniform init
        w1=xavier(keys[0], F, H1), b1=unif(keys[1], (1, H1), 1.0 / math.sqrt(F)),
        w2=xavier(keys[2], G, G),  b2=unif(keys[3], (1, G), gb),
        # fc_3 stored zero-padded to out_pad columns (lane-dense kernel store)
        w3p=jnp.pad(w3, ((0, 0), (0, out_pad - F))),
        b3p=jnp.pad(b3, ((0, 0), (0, out_pad - F))),
        w_phi=xavier(keys[6], E, G), b_phi=unif(keys[7], (1, G), 1.0 / math.sqrt(E)),
        # nn.GRUCell default uniform(-1/sqrt(G), 1/sqrt(G)); gates fused along columns (r, z, n)
        w_ih=unif(keys[8], (H1, 3 * G), gb), w_hh=unif(keys[9], (G, 3 * G), gb),
        b_ih=unif(keys[10], (1, 3 * G), gb), b_hh=unif(keys[11], (1, 3 * G), gb),
    )


def reference_forward(params, state, hx, tau, num_quantiles):
    """Pure-JAX reference (same math as the PyTorch forward, eval mode)."""
    B, F = state.shape
    G = hx.shape[1]
    R = B * num_quantiles
    E = params["w_phi"].shape[0]
    state_tile = jnp.broadcast_to(state[:, None, :], (B, num_quantiles, F)).reshape(R, F)
    pi_row = np.pi * jnp.arange(E, dtype=jnp.float32)[None, :]
    cos_tau = jnp.cos(jnp.broadcast_to(tau, (R, 1)) * pi_row)
    phi = jax.nn.relu(cos_tau @ params["w_phi"] + params["b_phi"])
    x = jax.nn.relu(state_tile @ params["w1"] + params["b1"])
    gi = x @ params["w_ih"] + params["b_ih"]
    gh = hx @ params["w_hh"] + params["b_hh"]
    r = jax.nn.sigmoid(gi[:, 0:G] + gh[:, 0:G])
    z = jax.nn.sigmoid(gi[:, G:2 * G] + gh[:, G:2 * G])
    n = jnp.tanh(gi[:, 2 * G:3 * G] + r * gh[:, 2 * G:3 * G])
    ghx = (1.0 - z) * n + z * hx
    y = ghx + jax.nn.relu(ghx @ params["w2"] + params["b2"])
    out = (y * phi) @ params["w3p"][:, :F] + params["b3p"][:, :F]
    zz = out.reshape(B, num_quantiles, F).transpose(0, 2, 1)
    return zz, ghx


if __name__ == "__main__":
    # Small shapes consistent with the module:
    # feature_len=8, gru_size=32, quantile_embedding_dim=16, num_quantiles=8, fc1_units=64
    F, G, E, N, H1 = 8, 32, 16, 8, 64
    # torch's state.expand(B, N, F) from a (B, F) state is only well-defined for B == 1
    B = 1
    R = B * N

    key = jax.random.PRNGKey(0)
    pk, sk, hk, tk = jax.random.split(key, 4)
    params = init_params(pk, F, G, E, H1)
    state = jax.random.normal(sk, (B, F), jnp.float32)
    hx = jax.random.normal(hk, (R, G), jnp.float32)
    tau = jax.random.uniform(tk, (R, 1), jnp.float32)

    z, ghx = iqn_forward(params, state, hx, tau, N)
    jax.block_until_ready((z, ghx))

    z_ref, ghx_ref = reference_forward(params, state, hx, tau, N)
    np.testing.assert_allclose(np.asarray(ghx), np.asarray(ghx_ref), rtol=5e-2, atol=5e-2)
    np.testing.assert_allclose(np.asarray(z), np.asarray(z_ref), rtol=5e-2, atol=5e-2)
    assert z.shape == (B, F, N) and ghx.shape == (R, G)
    print("KERNEL_OK")
</pallas_src>

<mosaic_0001>
module attributes {stable_mosaic.version = 11 : i64} {
  func.func @kernel(%arg0: memref<1x8xf32, #tpu.memory_space<vmem>>, %arg1: memref<8x1xf32, #tpu.memory_space<vmem>>, %arg2: memref<8x32xf32, #tpu.memory_space<vmem>>, %arg3: memref<16x32xf32, #tpu.memory_space<vmem>>, %arg4: memref<1x32xf32, #tpu.memory_space<vmem>>, %arg5: memref<8x64xf32, #tpu.memory_space<vmem>>, %arg6: memref<1x64xf32, #tpu.memory_space<vmem>>, %arg7: memref<64x96xf32, #tpu.memory_space<vmem>>, %arg8: memref<32x96xf32, #tpu.memory_space<vmem>>, %arg9: memref<1x96xf32, #tpu.memory_space<vmem>>, %arg10: memref<1x96xf32, #tpu.memory_space<vmem>>, %arg11: memref<32x32xf32, #tpu.memory_space<vmem>>, %arg12: memref<1x32xf32, #tpu.memory_space<vmem>>, %arg13: memref<32x128xf32, #tpu.memory_space<vmem>>, %arg14: memref<1x128xf32, #tpu.memory_space<vmem>>, %arg15: memref<8x128xf32, #tpu.memory_space<vmem>>, %arg16: memref<8x32xf32, #tpu.memory_space<vmem>>) attributes {dimension_semantics = [], scalar_prefetch = 0 : i64, scratch_operands = 0 : i64, tpu.core_type = #tpu.core_type<tc>} {
    %0 = tpu.iota {dimensions = array<i32: 1>} : vector<8x16xi32>
    %1 = arith.sitofp %0 : vector<8x16xi32> to vector<8x16xf32>
    %cst = arith.constant 3.14159274 : f32
    %2 = vector.broadcast %cst : f32 to vector<8x16xf32>
    %3 = arith.mulf %1, %2 : vector<8x16xf32>
    %c0 = arith.constant 0 : index
    %c0_0 = arith.constant 0 : index
    %4 = vector.load %arg1[%c0, %c0_0] : memref<8x1xf32, #tpu.memory_space<vmem>>, vector<8x1xf32>
    %5 = vector.broadcast %4 : vector<8x1xf32> to vector<8x16xf32>
    %6 = arith.mulf %5, %3 : vector<8x16xf32>
    %7 = math.cos %6 : vector<8x16xf32>
    %c0_1 = arith.constant 0 : index
    %c0_2 = arith.constant 0 : index
    %8 = vector.load %arg3[%c0_1, %c0_2] : memref<16x32xf32, #tpu.memory_space<vmem>>, vector<16x32xf32>
    %cst_3 = arith.constant dense<0.000000e+00> : vector<8x32xf32>
    %9 = tpu.matmul %7, %8, %cst_3 {dimension_numbers = #tpu.dot_dimension_numbers<[1], [0], [0], [1], [0, 0, 1, 1], [], []>} : vector<8x16xf32>, vector<16x32xf32>, vector<8x32xf32> -> vector<8x32xf32>
    %c0_4 = arith.constant 0 : index
    %c0_5 = arith.constant 0 : index
    %10 = vector.load %arg4[%c0_4, %c0_5] : memref<1x32xf32, #tpu.memory_space<vmem>>, vector<1x32xf32>
    %11 = vector.broadcast %10 : vector<1x32xf32> to vector<8x32xf32>
    %12 = arith.addf %9, %11 : vector<8x32xf32>
    %cst_6 = arith.constant 0.000000e+00 : f32
    %13 = vector.broadcast %cst_6 : f32 to vector<8x32xf32>
    %14 = arith.maximumf %12, %13 : vector<8x32xf32>
    %c0_7 = arith.constant 0 : index
    %c0_8 = arith.constant 0 : index
    %15 = vector.load %arg0[%c0_7, %c0_8] : memref<1x8xf32, #tpu.memory_space<vmem>>, vector<1x8xf32>
    %16 = vector.shape_cast %15 : vector<1x8xf32> to vector<1x8xf32>
    %17 = vector.broadcast %16 : vector<1x8xf32> to vector<8x8xf32>
    %c0_9 = arith.constant 0 : index
    %c0_10 = arith.constant 0 : index
    %18 = vector.load %arg5[%c0_9, %c0_10] : memref<8x64xf32, #tpu.memory_space<vmem>>, vector<8x64xf32>
    %cst_11 = arith.constant dense<0.000000e+00> : vector<8x64xf32>
    %19 = tpu.matmul %17, %18, %cst_11 {dimension_numbers = #tpu.dot_dimension_numbers<[1], [0], [0], [1], [0, 0, 1, 1], [], []>} : vector<8x8xf32>, vector<8x64xf32>, vector<8x64xf32> -> vector<8x64xf32>
    %c0_12 = arith.constant 0 : index
    %c0_13 = arith.constant 0 : index
    %20 = vector.load %arg6[%c0_12, %c0_13] : memref<1x64xf32, #tpu.memory_space<vmem>>, vector<1x64xf32>
    %21 = vector.broadcast %20 : vector<1x64xf32> to vector<8x64xf32>
    %22 = arith.addf %19, %21 : vector<8x64xf32>
    %cst_14 = arith.constant 0.000000e+00 : f32
    %23 = vector.broadcast %cst_14 : f32 to vector<8x64xf32>
    %24 = arith.maximumf %22, %23 : vector<8x64xf32>
    %c0_15 = arith.constant 0 : index
    %c0_16 = arith.constant 0 : index
    %25 = vector.load %arg2[%c0_15, %c0_16] : memref<8x32xf32, #tpu.memory_space<vmem>>, vector<8x32xf32>
    %c0_17 = arith.constant 0 : index
    %c0_18 = arith.constant 0 : index
    %26 = vector.load %arg7[%c0_17, %c0_18] : memref<64x96xf32, #tpu.memory_space<vmem>>, vector<64x96xf32>
    %cst_19 = arith.constant dense<0.000000e+00> : vector<8x96xf32>
    %27 = tpu.matmul %24, %26, %cst_19 {dimension_numbers = #tpu.dot_dimension_numbers<[1], [0], [0], [1], [0, 0, 1, 1], [], []>} : vector<8x64xf32>, vector<64x96xf32>, vector<8x96xf32> -> vector<8x96xf32>
    %c0_20 = arith.constant 0 : index
    %c0_21 = arith.constant 0 : index
    %28 = vector.load %arg9[%c0_20, %c0_21] : memref<1x96xf32, #tpu.memory_space<vmem>>, vector<1x96xf32>
    %29 = vector.broadcast %28 : vector<1x96xf32> to vector<8x96xf32>
    %30 = arith.addf %27, %29 : vector<8x96xf32>
    %c0_22 = arith.constant 0 : index
    %c0_23 = arith.constant 0 : index
    %31 = vector.load %arg8[%c0_22, %c0_23] : memref<32x96xf32, #tpu.memory_space<vmem>>, vector<32x96xf32>
    %cst_24 = arith.constant dense<0.000000e+00> : vector<8x96xf32>
    %32 = tpu.matmul %25, %31, %cst_24 {dimension_numbers = #tpu.dot_dimension_numbers<[1], [0], [0], [1], [0, 0, 1, 1], [], []>} : vector<8x32xf32>, vector<32x96xf32>, vector<8x96xf32> -> vector<8x96xf32>
    %c0_25 = arith.constant 0 : index
    %c0_26 = arith.constant 0 : index
    %33 = vector.load %arg10[%c0_25, %c0_26] : memref<1x96xf32, #tpu.memory_space<vmem>>, vector<1x96xf32>
    %34 = vector.broadcast %33 : vector<1x96xf32> to vector<8x96xf32>
    %35 = arith.addf %32, %34 : vector<8x96xf32>
    %36 = vector.extract_strided_slice %30 {offsets = [0, 0], sizes = [8, 32], strides = [1, 1]} : vector<8x96xf32> to vector<8x32xf32>
    %37 = vector.extract_strided_slice %35 {offsets = [0, 0], sizes = [8, 32], strides = [1, 1]} : vector<8x96xf32> to vector<8x32xf32>
    %38 = arith.addf %36, %37 : vector<8x32xf32>
    %39 = arith.negf %38 : vector<8x32xf32>
    %40 = math.exp %39 : vector<8x32xf32>
    %cst_27 = arith.constant 1.000000e+00 : f32
    %41 = vector.broadcast %cst_27 : f32 to vector<8x32xf32>
    %42 = arith.addf %41, %40 : vector<8x32xf32>
    %43 = arith.divf %41, %42 : vector<8x32xf32>
    %44 = vector.extract_strided_slice %30 {offsets = [0, 32], sizes = [8, 32], strides = [1, 1]} : vector<8x96xf32> to vector<8x32xf32>
    %45 = vector.extract_strided_slice %35 {offsets = [0, 32], sizes = [8, 32], strides = [1, 1]} : vector<8x96xf32> to vector<8x32xf32>
    %46 = arith.addf %44, %45 : vector<8x32xf32>
    %47 = arith.negf %46 : vector<8x32xf32>
    %48 = math.exp %47 : vector<8x32xf32>
    %cst_28 = arith.constant 1.000000e+00 : f32
    %49 = vector.broadcast %cst_28 : f32 to vector<8x32xf32>
    %50 = arith.addf %49, %48 : vector<8x32xf32>
    %51 = arith.divf %49, %50 : vector<8x32xf32>
    %52 = vector.extract_strided_slice %30 {offsets = [0, 64], sizes = [8, 32], strides = [1, 1]} : vector<8x96xf32> to vector<8x32xf32>
    %53 = vector.extract_strided_slice %35 {offsets = [0, 64], sizes = [8, 32], strides = [1, 1]} : vector<8x96xf32> to vector<8x32xf32>
    %54 = arith.mulf %43, %53 : vector<8x32xf32>
    %55 = arith.addf %52, %54 : vector<8x32xf32>
    %56 = math.tanh %55 : vector<8x32xf32>
    %cst_29 = arith.constant 1.000000e+00 : f32
    %57 = vector.broadcast %cst_29 : f32 to vector<8x32xf32>
    %58 = arith.subf %57, %51 : vector<8x32xf32>
    %59 = arith.mulf %58, %56 : vector<8x32xf32>
    %60 = arith.mulf %51, %25 : vector<8x32xf32>
    %61 = arith.addf %59, %60 : vector<8x32xf32>
    %c0_30 = arith.constant 0 : index
    %c0_31 = arith.constant 0 : index
    %62 = vector.load %arg16[%c0_30, %c0_31] : memref<8x32xf32, #tpu.memory_space<vmem>>, vector<8x32xf32>
    tpu.vector_store %arg16[%c0_30, %c0_31], %61 {strides = array<i32>} : memref<8x32xf32, #tpu.memory_space<vmem>>, vector<8x32xf32>,
    %c0_32 = arith.constant 0 : index
    %c0_33 = arith.constant 0 : index
    %63 = vector.load %arg11[%c0_32, %c0_33] : memref<32x32xf32, #tpu.memory_space<vmem>>, vector<32x32xf32>
    %cst_34 = arith.constant dense<0.000000e+00> : vector<8x32xf32>
    %64 = tpu.matmul %61, %63, %cst_34 {dimension_numbers = #tpu.dot_dimension_numbers<[1], [0], [0], [1], [0, 0, 1, 1], [], []>} : vector<8x32xf32>, vector<32x32xf32>, vector<8x32xf32> -> vector<8x32xf32>
    %c0_35 = arith.constant 0 : index
    %c0_36 = arith.constant 0 : index
    %65 = vector.load %arg12[%c0_35, %c0_36] : memref<1x32xf32, #tpu.memory_space<vmem>>, vector<1x32xf32>
    %66 = vector.broadcast %65 : vector<1x32xf32> to vector<8x32xf32>
    %67 = arith.addf %64, %66 : vector<8x32xf32>
    %cst_37 = arith.constant 0.000000e+00 : f32
    %68 = vector.broadcast %cst_37 : f32 to vector<8x32xf32>
    %69 = arith.maximumf %67, %68 : vector<8x32xf32>
    %70 = arith.addf %61, %69 : vector<8x32xf32>
    %71 = arith.mulf %70, %14 : vector<8x32xf32>
    %c0_38 = arith.constant 0 : index
    %c0_39 = arith.constant 0 : index
    %72 = vector.load %arg13[%c0_38, %c0_39] : memref<32x128xf32, #tpu.memory_space<vmem>>, vector<32x128xf32>
    %cst_40 = arith.constant dense<0.000000e+00> : vector<8x128xf32>
    %73 = tpu.matmul %71, %72, %cst_40 {dimension_numbers = #tpu.dot_dimension_numbers<[1], [0], [0], [1], [0, 0, 1, 1], [], []>} : vector<8x32xf32>, vector<32x128xf32>, vector<8x128xf32> -> vector<8x128xf32>
    %c0_41 = arith.constant 0 : index
    %c0_42 = arith.constant 0 : index
    %74 = vector.load %arg14[%c0_41, %c0_42] : memref<1x128xf32, #tpu.memory_space<vmem>>, vector<1x128xf32>
    %75 = vector.broadcast %74 : vector<1x128xf32> to vector<8x128xf32>
    %76 = arith.addf %73, %75 : vector<8x128xf32>
    %c0_43 = arith.constant 0 : index
    %c0_44 = arith.constant 0 : index
    %77 = vector.load %arg15[%c0_43, %c0_44] : memref<8x128xf32, #tpu.memory_space<vmem>>, vector<8x128xf32>
    tpu.vector_store %arg15[%c0_43, %c0_44], %76 {strides = array<i32>} : memref<8x128xf32, #tpu.memory_space<vmem>>, vector<8x128xf32>,
    return
  }
}

</mosaic_0001>

<llo_original>
// kernel: tpu_custom_call.1
$region0: #{tpu_custom_call.1}
  #allocation0 [shape = 'u32[]', space=smem, size = 0x4, offset = 0x4, fixed_abs, tag = 'smem constant byte address 0x4 - core index']
  #allocation1 [shape = 'u32[144,128]{1,0:T(1,128)}', space=vmem, size = 0x12000, scoped, tag = 'internal scratch']
  %s0 = inlined_call_operand.vmem [shape: f32[1,8], index: 0, kind: input, shape index: {}]
  %s1 = inlined_call_operand.vmem [shape: f32[8,1], index: 1, kind: input, shape index: {}]
  %s2 = inlined_call_operand.hbm [shape: f32[8,32], index: 2, kind: input, shape index: {}]
  %s3 = inlined_call_operand.hbm [shape: f32[16,32], index: 3, kind: input, shape index: {}]
  %s4 = inlined_call_operand.vmem [shape: f32[1,32], index: 4, kind: input, shape index: {}]
  %s5 = inlined_call_operand.hbm [shape: f32[8,64], index: 5, kind: input, shape index: {}]
  %s6 = inlined_call_operand.vmem [shape: f32[1,64], index: 6, kind: input, shape index: {}]
  %s7 = inlined_call_operand.hbm [shape: f32[64,96], index: 7, kind: input, shape index: {}]
  %s8 = inlined_call_operand.vmem [shape: f32[32,96], index: 8, kind: input, shape index: {}]
  %s9 = inlined_call_operand.vmem [shape: f32[1,96], index: 9, kind: input, shape index: {}]
  %s10 = inlined_call_operand.vmem [shape: f32[1,96], index: 10, kind: input, shape index: {}]
  %s11 = inlined_call_operand.hbm [shape: f32[32,32], index: 11, kind: input, shape index: {}]
  %s12 = inlined_call_operand.vmem [shape: f32[1,32], index: 12, kind: input, shape index: {}]
  %s13 = inlined_call_operand.hbm [shape: f32[32,128], index: 13, kind: input, shape index: {}]
  %s14 = inlined_call_operand.vmem [shape: f32[1,128], index: 14, kind: input, shape index: {}]
  %s15 = inlined_call_operand.hbm [shape: f32[8,128], index: 15, kind: output, shape index: {0}]
  %s16 = inlined_call_operand.hbm [shape: f32[8,32], index: 16, kind: output, shape index: {1}]
  %17 = xla_tuple %s15, %s16
  %s18 = sld [smem:[#allocation0]]
  $region102: #{tpu_custom_call.1} parent=0
    _
  %s20 = ssub.s32 1, %s18
  %s21 = scalar_select 0, %s20, %s18
  $region1: #{tpu_custom_call.1} parent=0
    #allocation2 [shape = 'u8[4096]{0}', space=vmem, size = 0x1000, scoped, tag = 'input window, operand 2, single buffered']
    #allocation3 [shape = 's32[1]{0}', space=sflag, size = 0x4, scoped, tag = 'scoped memory for tpu_custom_call.1']
    #allocation4 [shape = 's32[1]{0}', space=sflag, size = 0x4, scoped, tag = 'scoped memory for tpu_custom_call.1']
    #allocation5 [shape = 'u8[8192]{0}', space=vmem, size = 0x2000, scoped, tag = 'input window, operand 3, single buffered']
    #allocation6 [shape = 's32[1]{0}', space=sflag, size = 0x4, scoped, tag = 'scoped memory for tpu_custom_call.1']
    #allocation7 [shape = 'u8[4096]{0}', space=vmem, size = 0x1000, scoped, tag = 'input window, operand 5, single buffered']
    #allocation8 [shape = 'u8[32768]{0}', space=vmem, size = 0x8000, scoped, tag = 'input window, operand 7, single buffered']
    #allocation9 [shape = 's32[1]{0}', space=sflag, size = 0x4, scoped, tag = 'scoped memory for tpu_custom_call.1']
    #allocation10 [shape = 'u8[16384]{0}', space=vmem, size = 0x4000, scoped, tag = 'input window, operand 11, single buffered']
    #allocation11 [shape = 'u8[16384]{0}', space=vmem, size = 0x4000, scoped, tag = 'input window, operand 13, single buffered']
    #allocation12 [shape = 's32[1]{0}', space=sflag, size = 0x4, scoped, tag = 'scoped memory for tpu_custom_call.1']
    #allocation13 [shape = 'u8[4096]{0}', space=vmem, size = 0x1000, scoped, tag = 'output window, operand 0, single buffered']
    #allocation14 [shape = 'u8[4096]{0}', space=vmem, size = 0x1000, scoped, tag = 'output window, operand 1, single buffered']
    #allocation15 [shape = 's32[1]{0}', space=sflag, size = 0x4, scoped, tag = 'scoped memory for tpu_custom_call.1']
    %22 = vsyncpa [#allocation3], 0
    %23 = vsyncpa [#allocation6], 0
    %24 = vsyncpa [#allocation9], 0
    %25 = vsyncpa [#allocation12], 0
    %26 = vsyncpa [#allocation4], 0
    %27 = vsyncpa [#allocation15], 0
    // Predicated region
    $region2: #{tpu_custom_call.1} parent=1 // pred_check
      _
    $region3: #{tpu_custom_call.1} parent=1 // pred_check_branch
      %29 = sbr.rel (0) target = $region5
    $region4: #{tpu_custom_call.1} parent=1 // pred_region
      _
    $region5: #{tpu_custom_call.1} parent=1 // pred_fallthru
      _
    // Predicated region
    $region6: #{tpu_custom_call.1} parent=1 // pred_check
      _
    $region7: #{tpu_custom_call.1} parent=1 // pred_check_branch
      %31 = sbr.rel (0) target = $region9
    $region8: #{tpu_custom_call.1} parent=1 // pred_region
      _
    $region9: #{tpu_custom_call.1} parent=1 // pred_fallthru
      _
    // Predicated region
    $region10: #{tpu_custom_call.1} parent=1 // pred_check
      _
    $region11: #{tpu_custom_call.1} parent=1 // pred_check_branch
      %33 = sbr.rel (0) target = $region13
    $region12: #{tpu_custom_call.1} parent=1 // pred_region
      %s35 = ssub.s32 128, 128
      %36 = vsyncadd [#allocation3], %s35
      %s38 = sshll.u32 [#allocation2], 4
      %s39 = int_to_ptr.vmem [resolvable:$true] %s38
      %41 = dma.hbm_to_vmem [thread:$0]  %s2, 128, %s39, [#allocation3]
    $region13: #{tpu_custom_call.1} parent=1 // pred_fallthru
      _
    // Predicated region
    $region14: #{tpu_custom_call.1} parent=1 // pred_check
      _
    $region15: #{tpu_custom_call.1} parent=1 // pred_check_branch
      %43 = sbr.rel (0) target = $region17
    $region16: #{tpu_custom_call.1} parent=1 // pred_region
      %s45 = ssub.s32 256, 256
      %46 = vsyncadd [#allocation6], %s45
      %s47 = sshll.u32 [#allocation5], 4
      %s48 = int_to_ptr.vmem [resolvable:$true] %s47
      %53 = dma.hbm_to_vmem [thread:$0]  %s3, 256, %s48, [#allocation6], 128, 128, 8
    $region17: #{tpu_custom_call.1} parent=1 // pred_fallthru
      _
    // Predicated region
    $region18: #{tpu_custom_call.1} parent=1 // pred_check
      _
    $region19: #{tpu_custom_call.1} parent=1 // pred_check_branch
      %55 = sbr.rel (0) target = $region21
    $region20: #{tpu_custom_call.1} parent=1 // pred_region
      _
    $region21: #{tpu_custom_call.1} parent=1 // pred_fallthru
      _
    // Predicated region
    $region22: #{tpu_custom_call.1} parent=1 // pred_check
      _
    $region23: #{tpu_custom_call.1} parent=1 // pred_check_branch
      %57 = sbr.rel (0) target = $region25
    $region24: #{tpu_custom_call.1} parent=1 // pred_region
      %s59 = ssub.s32 128, 128
      %60 = vsyncadd [#allocation6], %s59
      %s62 = sshll.u32 [#allocation7], 4
      %s63 = int_to_ptr.vmem [resolvable:$true] %s62
      %65 = dma.hbm_to_vmem [thread:$0]  %s5, 128, %s63, [#allocation6]
    $region25: #{tpu_custom_call.1} parent=1 // pred_fallthru
      _
    // Predicated region
    $region26: #{tpu_custom_call.1} parent=1 // pred_check
      _
    $region27: #{tpu_custom_call.1} parent=1 // pred_check_branch
      %67 = sbr.rel (0) target = $region29
    $region28: #{tpu_custom_call.1} parent=1 // pred_region
      _
    $region29: #{tpu_custom_call.1} parent=1 // pred_fallthru
      _
    // Predicated region
    $region30: #{tpu_custom_call.1} parent=1 // pred_check
      _
    $region31: #{tpu_custom_call.1} parent=1 // pred_check_branch
      %69 = sbr.rel (0) target = $region33
    $region32: #{tpu_custom_call.1} parent=1 // pred_region
      %s71 = ssub.s32 1024, 1024
      %72 = vsyncadd [#allocation9], %s71
      %s73 = sshll.u32 [#allocation8], 4
      %s74 = int_to_ptr.vmem [resolvable:$true] %s73
      %79 = dma.hbm_to_vmem [thread:$0]  %s7, 1024, %s74, [#allocation9], 128, 128, 8
    $region33: #{tpu_custom_call.1} parent=1 // pred_fallthru
      _
    // Predicated region
    $region34: #{tpu_custom_call.1} parent=1 // pred_check
      _
    $region35: #{tpu_custom_call.1} parent=1 // pred_check_branch
      %81 = sbr.rel (0) target = $region37
    $region36: #{tpu_custom_call.1} parent=1 // pred_region
      _
    $region37: #{tpu_custom_call.1} parent=1 // pred_fallthru
      _
    // Predicated region
    $region38: #{tpu_custom_call.1} parent=1 // pred_check
      _
    $region39: #{tpu_custom_call.1} parent=1 // pred_check_branch
      %83 = sbr.rel (0) target = $region41
    $region40: #{tpu_custom_call.1} parent=1 // pred_region
      _
    $region41: #{tpu_custom_call.1} parent=1 // pred_fallthru
      _
    // Predicated region
    $region42: #{tpu_custom_call.1} parent=1 // pred_check
      _
    $region43: #{tpu_custom_call.1} parent=1 // pred_check_branch
      %85 = sbr.rel (0) target = $region45
    $region44: #{tpu_custom_call.1} parent=1 // pred_region
      _
    $region45: #{tpu_custom_call.1} parent=1 // pred_fallthru
      _
    // Predicated region
    $region46: #{tpu_custom_call.1} parent=1 // pred_check
      _
    $region47: #{tpu_custom_call.1} parent=1 // pred_check_branch
      %87 = sbr.rel (0) target = $region49
    $region48: #{tpu_custom_call.1} parent=1 // pred_region
      %s89 = ssub.s32 512, 512
      %90 = vsyncadd [#allocation9], %s89
      %s91 = sshll.u32 [#allocation10], 4
      %s92 = int_to_ptr.vmem [resolvable:$true] %s91
      %97 = dma.hbm_to_vmem [thread:$0]  %s11, 512, %s92, [#allocation9], 128, 128, 8
    $region49: #{tpu_custom_call.1} parent=1 // pred_fallthru
      _
    // Predicated region
    $region50: #{tpu_custom_call.1} parent=1 // pred_check
      _
    $region51: #{tpu_custom_call.1} parent=1 // pred_check_branch
      %99 = sbr.rel (0) target = $region53
    $region52: #{tpu_custom_call.1} parent=1 // pred_region
      _
    $region53: #{tpu_custom_call.1} parent=1 // pred_fallthru
      _
    // Predicated region
    $region54: #{tpu_custom_call.1} parent=1 // pred_check
      _
    $region55: #{tpu_custom_call.1} parent=1 // pred_check_branch
      %101 = sbr.rel (0) target = $region57
    $region56: #{tpu_custom_call.1} parent=1 // pred_region
      %s103 = ssub.s32 512, 512
      %104 = vsyncadd [#allocation12], %s103
      %s105 = sshll.u32 [#allocation11], 4
      %s106 = int_to_ptr.vmem [resolvable:$true] %s105
      %111 = dma.hbm_to_vmem [thread:$0]  %s13, 512, %s106, [#allocation12], 128, 128, 8
    $region57: #{tpu_custom_call.1} parent=1 // pred_fallthru
      _
    // Predicated region
    $region58: #{tpu_custom_call.1} parent=1 // pred_check
      _
    $region59: #{tpu_custom_call.1} parent=1 // pred_check_branch
      %113 = sbr.rel (0) target = $region61
    $region60: #{tpu_custom_call.1} parent=1 // pred_region
      _
    $region61: #{tpu_custom_call.1} parent=1 // pred_fallthru
      _
    // Predicated region
    $region62: #{tpu_custom_call.1} parent=1 // pred_check
      _
    $region63: #{tpu_custom_call.1} parent=1 // pred_check_branch
      %115 = sbr.rel (0) target = $region65
    $region64: #{tpu_custom_call.1} parent=1 // pred_region
      %116 = dma.done [#allocation3], 128
    $region65: #{tpu_custom_call.1} parent=1 // pred_fallthru
      _
    // Predicated region
    $region66: #{tpu_custom_call.1} parent=1 // pred_check
      _
    $region67: #{tpu_custom_call.1} parent=1 // pred_check_branch
      %118 = sbr.rel (0) target = $region69
    $region68: #{tpu_custom_call.1} parent=1 // pred_region
      %119 = dma.done [#allocation6], 256
    $region69: #{tpu_custom_call.1} parent=1 // pred_fallthru
      _
    // Predicated region
    $region70: #{tpu_custom_call.1} parent=1 // pred_check
      _
    $region71: #{tpu_custom_call.1} parent=1 // pred_check_branch
      %121 = sbr.rel (0) target = $region73
    $region72: #{tpu_custom_call.1} parent=1 // pred_region
      %122 = dma.done [#allocation6], 128
    $region73: #{tpu_custom_call.1} parent=1 // pred_fallthru
      _
    // Predicated region
    $region74: #{tpu_custom_call.1} parent=1 // pred_check
      _
    $region75: #{tpu_custom_call.1} parent=1 // pred_check_branch
      %124 = sbr.rel (0) target = $region77
    $region76: #{tpu_custom_call.1} parent=1 // pred_region
      %125 = dma.done [#allocation9], 1024
    $region77: #{tpu_custom_call.1} parent=1 // pred_fallthru
      _
    // Predicated region
    $region78: #{tpu_custom_call.1} parent=1 // pred_check
      _
    $region79: #{tpu_custom_call.1} parent=1 // pred_check_branch
      %127 = sbr.rel (0) target = $region81
    $region80: #{tpu_custom_call.1} parent=1 // pred_region
      %128 = dma.done [#allocation9], 512
    $region81: #{tpu_custom_call.1} parent=1 // pred_fallthru
      _
    // Predicated region
    $region82: #{tpu_custom_call.1} parent=1 // pred_check
      _
    $region83: #{tpu_custom_call.1} parent=1 // pred_check_branch
      %130 = sbr.rel (0) target = $region85
    $region84: #{tpu_custom_call.1} parent=1 // pred_region
      %131 = dma.done [#allocation12], 512
    $region85: #{tpu_custom_call.1} parent=1 // pred_fallthru
      _
    %v132 = vlaneseq
    %v133 = vand.u32 %v132, 127
    %v134 = vcvt.s32.f32 %v133
    %v135 = vmul.f32 %v134, 3.1415927
    %v136 = vld [vmem:[%s1] sm:$0xff]
    %138 = vset.pattern.permute.xlu0 0
    %139 = vperm.xlu0 %138, %v136
    %v140 = vpop.permute.xlu0 %139
    %v142 = vmul.f32 %v140, %v135
    %v143 = vand.u32 2147483647, %v142
    %vm144 = vcmp.le.f32.partialorder %v143, 0.7853982
    %vm145 = vcmp.lt.s32.totalorder %v142, 0
    %v146 = vand.u32 %v142, 2139095040
    %v147 = vshrl.u32 %v146, 23
    %v148 = vsub.s32 %v147, 127
    %v149 = vand.u32 2147483647, %v142
    %v150 = vand.u32 %v149, 8388607
    %v151 = vor.u32 %v150, 8388608
    %v152 = vsub.s32 0, %v151
    %v153 = vadd.s32 %v148, 1
    %vm154 = vcmp.gt.s32.totalorder %v153, 0
    %v155 = vsel %vm154, %v153, 0
    %v156 = vshrl.u32 %v155, 5
    %v157 = vand.u32 %v155, 31
    %v158 = vsub.s32 32, %v157
    %v159 = vshrl.u32 683565275, %v158
    %v160 = vshll.u32 683565275, %v157
    %v161 = vshrl.u32 2475754826, %v158
    %v162 = vor.u32 %v160, %v161
    %v163 = vshll.u32 2475754826, %v157
    %v164 = vshrl.u32 2131351028, %v158
    %v165 = vor.u32 %v163, %v164
    %v166 = vshll.u32 2131351028, %v157
    %v167 = vshrl.u32 2102212464, %v158
    %v168 = vor.u32 %v166, %v167
    %v169 = vshll.u32 2102212464, %v157
    %v170 = vshrl.u32 920167782, %v158
    %v171 = vor.u32 %v169, %v170
    %v172 = vshll.u32 920167782, %v157
    %v173 = vshrl.u32 1326507024, %v158
    %v174 = vor.u32 %v172, %v173
    %vm175 = vcmp.lt.s32.totalorder %v156, 1
    %vm176 = vcmp.lt.s32.totalorder %v156, 2
    %vm177 = vcmp.lt.s32.totalorder %v156, 3
    %vm178 = vcmp.lt.s32.totalorder %v156, 4
    %v179 = vsel %vm175, %v159, %v162
    %v180 = vsel %vm178, %v168, 2102212464
    %v181 = vsel %vm177, %v165, %v180
    %v182 = vsel %vm176, %v179, %v181
    %v183 = vsel %vm175, %v162, %v165
    %v184 = vsel %vm178, %v171, 920167782
    %v185 = vsel %vm177, %v168, %v184
    %v186 = vsel %vm176, %v183, %v185
    %v187 = vsel %vm175, %v165, %v168
    %v188 = vsel %vm178, %v174, 1326507024
    %v189 = vsel %vm177, %v171, %v188
    %v190 = vsel %vm176, %v187, %v189
    %v191 = vshll.u32 %v151, 8
    %v192 = vmul.u32.u64.compose %v191, %v190
    %v193 = vextract.low.u32 %v192
    %v194 = vextract.high.u32 %v192
    %v195 = vmul.u32.u64.compose %v191, %v186
    %v196 = vextract.low.u32 %v195
    %v197 = vextract.high.u32 %v195
    %v198 = vmul.u32 %v191, %v182
    %v199 = vadd.s32 %v194, %v196
    %vm200 = vc.u32 %v194, %v196
    %v201 = vadd.s32 %v197, 1
    %v202 = vsel %vm200, %v201, %v197
    %v203 = vadd.s32 %v198, %v202
    %v204 = vadd.s32 %v203, 536870912
    %v205 = vshrl.u32 %v204, 30
    %v206 = vshll.u32 %v205, 30
    %v207 = vsub.s32 %v203, %v206
    %vm208 = vcmp.lt.s32.totalorder %v207, 0
    %v209 = vsub.s32 0, %v207
    %v210 = vsel %vm208, %v209, %v207
    %v211 = vclz %v210
    %v212 = vsub.s32 %v211, 2
    %vm213 = vcmp.gt.s32.totalorder 0, %v212
    %v214 = vsel %vm213, 0, %v212
    %v215 = vsub.s32 32, %v214
    %v216 = vshll.u32 %v207, %v214
    %v217 = vshrl.u32 %v199, %v215
    %v218 = vor.u32 %v216, %v217
    %v219 = vsub.s32 4294967266, %v214
    %v220 = vadd.s32 %v219, 127
    %v221 = vshll.u32 %v220, 23
    %v222 = vor.u32 4788187, %v221
    %v223 = vand.u32 2147483647, %v222
    %v225 = vcvt.s32.f32 %v218
    %v226 = vmul.f32 %v225, %v223
    %v227 = vxor.u32 %v226, 2147483648
    %v228 = vsel %vm145, %v227, %v226
    %v229 = vsub.s32 4, %v205
    %v230 = vsel %vm145, %v229, %v205
    %v231 = vsel %vm144, %v142, %v228
    %v232 = vsel %vm144, 0, %v230
    %v233 = vcosq.f32.pop %v231
    %v234 = vsinq.f32.pop %v231
    %vm235 = vweird.f32 %v142
    %v236 = vand.u32 %v232, 3
    %vm237 = vcmp.lt.s32.totalorder %v236, 2
    %vm238 = vcmp.eq.s32.totalorder %v236, 0
    %v239 = vxor.u32 %v234, 2147483648
    %v240 = vsel %vm238, %v233, %v239
    %vm241 = vcmp.eq.s32.totalorder %v236, 2
    %v242 = vxor.u32 %v233, 2147483648
    %v243 = vsel %vm241, %v242, %v234
    %v244 = vsel %vm237, %v240, %v243
    %v245 = vsel %vm235, nan, %v244
    %v246 = vld [vmem:[#allocation5] sm:$0xff]
    %v247 = vld [vmem:[#allocation5 + $0x8] sm:$0xff]
    %v248 = vld [vmem:[%s4] sm:$0x1]
    %v250 = vlaneseq
    %v251 = vshrl.u32 %v250, 7
    %v252 = vsub.s32 0, %v251
    %v253 = vrot.slane %v248, %v252
    %vm255 = vcmask 130048
    %v257 = vsel %vm255, %v245, 0
    %259 = vmatprep.subr.mxu0 0.0
    %260 = vmatpush1.msra.mxu0 %v246
    %261 = vmatprep.subr.mxu0 0.0
    %262 = vmatpush1.msra.mxu0 %v247
    %263 = vmatprep.subr.mxu0 0.0
    %264 = vmatpush1.msra.mxu0 0.0
    %265 = vmatprep.subr.mxu0 0.0
    %266 = vmatpush1.msra.mxu0 0.0
    %267 = vmatprep.subr.mxu0 0.0
    %268 = vmatpush1.msra.mxu0 0.0
    %269 = vmatprep.subr.mxu0 0.0
    %270 = vmatpush1.msra.mxu0 0.0
    %271 = vmatprep.subr.mxu0 0.0
    %272 = vmatpush1.msra.mxu0 0.0
    %273 = vmatprep.subr.mxu0 0.0
    %274 = vmatpush1.msra.mxu0 0.0
    %275 = vmatprep.subr.mxu0 0.0
    %276 = vmatpush1.msra.mxu0 0.0
    %277 = vmatprep.subr.mxu0 0.0
    %278 = vmatpush1.msra.mxu0 0.0
    %279 = vmatprep.subr.mxu0 0.0
    %280 = vmatpush1.msra.mxu0 0.0
    %281 = vmatprep.subr.mxu0 0.0
    %282 = vmatpush1.msra.mxu0 0.0
    %283 = vmatprep.subr.mxu0 0.0
    %284 = vmatpush1.msra.mxu0 0.0
    %285 = vmatprep.subr.mxu0 0.0
    %286 = vmatpush1.msra.mxu0 0.0
    %287 = vmatprep.subr.mxu0 0.0
    %288 = vmatpush1.msra.mxu0 0.0
    %289 = vmatprep.subr.mxu0 0.0
    %290 = vmatpush1.msra.mxu0 0.0
    %291 = vmatprep.subr.mxu0 0.0
    %292 = vmatpush1.msra.mxu0 0.0
    %293 = vmatprep.subr.mxu0 0.0
    %294 = vmatpush1.msra.mxu0 0.0
    %295 = vmatprep.subr.mxu0 0.0
    %296 = vmatpush1.msra.mxu0 0.0
    %297 = vmatprep.subr.mxu0 0.0
    %298 = vmatpush1.msra.mxu0 0.0
    %299 = vmatprep.subr.mxu0 0.0
    %300 = vmatpush1.msra.mxu0 0.0
    %301 = vmatprep.subr.mxu0 0.0
    %302 = vmatpush1.msra.mxu0 0.0
    %303 = vmatprep.subr.mxu0 0.0
    %304 = vmatpush1.msra.mxu0 0.0
    %305 = vmatprep.subr.mxu0 0.0
    %306 = vmatpush1.msra.mxu0 0.0
    %307 = vmatprep.subr.mxu0 0.0
    %308 = vmatpush1.msra.mxu0 0.0
    %309 = vmatprep.subr.mxu0 0.0
    %310 = vmatpush1.msra.mxu0 0.0
    %311 = vmatprep.subr.mxu0 0.0
    %312 = vmatpush1.msra.mxu0 0.0
    %313 = vmatprep.subr.mxu0 0.0
    %314 = vmatpush1.msra.mxu0 0.0
    %315 = vmatprep.subr.mxu0 0.0
    %316 = vmatpush1.msra.mxu0 0.0
    %317 = vmatprep.subr.mxu0 0.0
    %318 = vmatpush1.msra.mxu0 0.0
    %319 = vmatprep.subr.mxu0 0.0
    %320 = vmatpush1.msra.mxu0 0.0
    %321 = vmatprep.subr.mxu0 0.0
    %322 = vmatpush1.msra.mxu0 0.0
    %323 = vmatprep.mubr.f32.mxu0 0.0
    %324 = vmatmul.mubr.f32.gmra.mrb[0].mxu0 %v257
    %v325 = vpop.f32.mrb[0].mxu0
    %v326 = vadd.f32 %v253, %v325
    %v327 = vpop.f32.mrb[0].mxu0
    %328 = vdwg.mxu0
    %v329 = vmax.f32 %v326, 0.0
    %v330 = vld [vmem:[%s0] sm:$0x1]
    %v332 = vlaneseq
    %v333 = vshrl.u32 %v332, 7
    %v334 = vsub.s32 0, %v333
    %v335 = vrot.slane %v330, %v334
    %v336 = vld [vmem:[#allocation7] sm:$0xff]
    %v337 = vld [vmem:[%s6] sm:$0x1]
    %v339 = vlaneseq
    %v340 = vshrl.u32 %v339, 7
    %v341 = vsub.s32 0, %v340
    %v342 = vrot.slane %v337, %v341
    %vm344 = vcmask 64512
    %v345 = vsel %vm344, %v335, 0
    %347 = vmatprep.subr.mxu0 0.0
    %348 = vmatpush1.msra.mxu0 %v336
    %349 = vmatprep.subr.mxu0 0.0
    %350 = vmatpush1.msra.mxu0 0.0
    %351 = vmatprep.subr.mxu0 0.0
    %352 = vmatpush1.msra.mxu0 0.0
    %353 = vmatprep.subr.mxu0 0.0
    %354 = vmatpush1.msra.mxu0 0.0
    %355 = vmatprep.subr.mxu0 0.0
    %356 = vmatpush1.msra.mxu0 0.0
    %357 = vmatprep.subr.mxu0 0.0
    %358 = vmatpush1.msra.mxu0 0.0
    %359 = vmatprep.subr.mxu0 0.0
    %360 = vmatpush1.msra.mxu0 0.0
    %361 = vmatprep.subr.mxu0 0.0
    %362 = vmatpush1.msra.mxu0 0.0
    %363 = vmatprep.subr.mxu0 0.0
    %364 = vmatpush1.msra.mxu0 0.0
    %365 = vmatprep.subr.mxu0 0.0
    %366 = vmatpush1.msra.mxu0 0.0
    %367 = vmatprep.subr.mxu0 0.0
    %368 = vmatpush1.msra.mxu0 0.0
    %369 = vmatprep.subr.mxu0 0.0
    %370 = vmatpush1.msra.mxu0 0.0
    %371 = vmatprep.subr.mxu0 0.0
    %372 = vmatpush1.msra.mxu0 0.0
    %373 = vmatprep.subr.mxu0 0.0
    %374 = vmatpush1.msra.mxu0 0.0
    %375 = vmatprep.subr.mxu0 0.0
    %376 = vmatpush1.msra.mxu0 0.0
    %377 = vmatprep.subr.mxu0 0.0
    %378 = vmatpush1.msra.mxu0 0.0
    %379 = vmatprep.subr.mxu0 0.0
    %380 = vmatpush1.msra.mxu0 0.0
    %381 = vmatprep.subr.mxu0 0.0
    %382 = vmatpush1.msra.mxu0 0.0
    %383 = vmatprep.subr.mxu0 0.0
    %384 = vmatpush1.msra.mxu0 0.0
    %385 = vmatprep.subr.mxu0 0.0
    %386 = vmatpush1.msra.mxu0 0.0
    %387 = vmatprep.subr.mxu0 0.0
    %388 = vmatpush1.msra.mxu0 0.0
    %389 = vmatprep.subr.mxu0 0.0
    %390 = vmatpush1.msra.mxu0 0.0
    %391 = vmatprep.subr.mxu0 0.0
    %392 = vmatpush1.msra.mxu0 0.0
    %393 = vmatprep.subr.mxu0 0.0
    %394 = vmatpush1.msra.mxu0 0.0
    %395 = vmatprep.subr.mxu0 0.0
    %396 = vmatpush1.msra.mxu0 0.0
    %397 = vmatprep.subr.mxu0 0.0
    %398 = vmatpush1.msra.mxu0 0.0
    %399 = vmatprep.subr.mxu0 0.0
    %400 = vmatpush1.msra.mxu0 0.0
    %401 = vmatprep.subr.mxu0 0.0
    %402 = vmatpush1.msra.mxu0 0.0
    %403 = vmatprep.subr.mxu0 0.0
    %404 = vmatpush1.msra.mxu0 0.0
    %405 = vmatprep.subr.mxu0 0.0
    %406 = vmatpush1.msra.mxu0 0.0
    %407 = vmatprep.subr.mxu0 0.0
    %408 = vmatpush1.msra.mxu0 0.0
    %409 = vmatprep.subr.mxu0 0.0
    %410 = vmatpush1.msra.mxu0 0.0
    %411 = vmatprep.mubr.f32.mxu0 0.0
    %412 = vmatmul.mubr.f32.gmra.mrb[0].mxu0 %v345
    %v413 = vpop.f32.mrb[0].mxu0
    %v414 = vadd.f32 %v342, %v413
    %v415 = vpop.f32.mrb[0].mxu0
    %416 = vdwg.mxu0
    %v417 = vmax.f32 %v414, 0.0
    %v418 = vld [vmem:[#allocation2] sm:$0xff]
    %v419 = vld [vmem:[#allocation8] sm:$0xff]
    %v420 = vld [vmem:[#allocation8 + $0x8] sm:$0xff]
    %v421 = vld [vmem:[#allocation8 + $0x10] sm:$0xff]
    %v422 = vld [vmem:[#allocation8 + $0x18] sm:$0xff]
    %v423 = vld [vmem:[#allocation8 + $0x20] sm:$0xff]
    %v424 = vld [vmem:[#allocation8 + $0x28] sm:$0xff]
    %v425 = vld [vmem:[#allocation8 + $0x30] sm:$0xff]
    %v426 = vld [vmem:[#allocation8 + $0x38] sm:$0xff]
    %v427 = vld [vmem:[%s9] sm:$0x1]
    %v429 = vlaneseq
    %v430 = vshrl.u32 %v429, 7
    %v431 = vsub.s32 0, %v430
    %v432 = vrot.slane %v427, %v431
    %vm434 = vcmask 523264
    %v436 = vsel %vm434, %v417, 0
    %438 = vmatprep.subr.mxu0 0.0
    %439 = vmatpush1.msra.mxu0 %v419
    %440 = vmatprep.subr.mxu0 0.0
    %441 = vmatpush1.msra.mxu0 %v420
    %442 = vmatprep.subr.mxu0 0.0
    %443 = vmatpush1.msra.mxu0 %v421
    %444 = vmatprep.subr.mxu0 0.0
    %445 = vmatpush1.msra.mxu0 %v422
    %446 = vmatprep.subr.mxu0 0.0
    %447 = vmatpush1.msra.mxu0 %v423
    %448 = vmatprep.subr.mxu0 0.0
    %449 = vmatpush1.msra.mxu0 %v424
    %450 = vmatprep.subr.mxu0 0.0
    %451 = vmatpush1.msra.mxu0 %v425
    %452 = vmatprep.subr.mxu0 0.0
    %453 = vmatpush1.msra.mxu0 %v426
    %454 = vmatprep.subr.mxu0 0.0
    %455 = vmatpush1.msra.mxu0 0.0
    %456 = vmatprep.subr.mxu0 0.0
    %457 = vmatpush1.msra.mxu0 0.0
    %458 = vmatprep.subr.mxu0 0.0
    %459 = vmatpush1.msra.mxu0 0.0
    %460 = vmatprep.subr.mxu0 0.0
    %461 = vmatpush1.msra.mxu0 0.0
    %462 = vmatprep.subr.mxu0 0.0
    %463 = vmatpush1.msra.mxu0 0.0
    %464 = vmatprep.subr.mxu0 0.0
    %465 = vmatpush1.msra.mxu0 0.0
    %466 = vmatprep.subr.mxu0 0.0
    %467 = vmatpush1.msra.mxu0 0.0
    %468 = vmatprep.subr.mxu0 0.0
    %469 = vmatpush1.msra.mxu0 0.0
    %470 = vmatprep.subr.mxu0 0.0
    %471 = vmatpush1.msra.mxu0 0.0
    %472 = vmatprep.subr.mxu0 0.0
    %473 = vmatpush1.msra.mxu0 0.0
    %474 = vmatprep.subr.mxu0 0.0
    %475 = vmatpush1.msra.mxu0 0.0
    %476 = vmatprep.subr.mxu0 0.0
    %477 = vmatpush1.msra.mxu0 0.0
    %478 = vmatprep.subr.mxu0 0.0
    %479 = vmatpush1.msra.mxu0 0.0
    %480 = vmatprep.subr.mxu0 0.0
    %481 = vmatpush1.msra.mxu0 0.0
    %482 = vmatprep.subr.mxu0 0.0
    %483 = vmatpush1.msra.mxu0 0.0
    %484 = vmatprep.subr.mxu0 0.0
    %485 = vmatpush1.msra.mxu0 0.0
    %486 = vmatprep.subr.mxu0 0.0
    %487 = vmatpush1.msra.mxu0 0.0
    %488 = vmatprep.subr.mxu0 0.0
    %489 = vmatpush1.msra.mxu0 0.0
    %490 = vmatprep.subr.mxu0 0.0
    %491 = vmatpush1.msra.mxu0 0.0
    %492 = vmatprep.subr.mxu0 0.0
    %493 = vmatpush1.msra.mxu0 0.0
    %494 = vmatprep.subr.mxu0 0.0
    %495 = vmatpush1.msra.mxu0 0.0
    %496 = vmatprep.subr.mxu0 0.0
    %497 = vmatpush1.msra.mxu0 0.0
    %498 = vmatprep.subr.mxu0 0.0
    %499 = vmatpush1.msra.mxu0 0.0
    %500 = vmatprep.subr.mxu0 0.0
    %501 = vmatpush1.msra.mxu0 0.0
    %502 = vmatprep.mubr.f32.mxu0 0.0
    %503 = vmatmul.mubr.f32.gmra.mrb[0].mxu0 %v436
    %v504 = vpop.f32.mrb[0].mxu0
    %v505 = vadd.f32 %v432, %v504
    %v506 = vpop.f32.mrb[0].mxu0
    %507 = vdwg.mxu0
    %v508 = vld [vmem:[%s8] sm:$0xff]
    %v509 = vld [vmem:[%s8 + $0x8] sm:$0xff]
    %v510 = vld [vmem:[%s8 + $0x10] sm:$0xff]
    %v511 = vld [vmem:[%s8 + $0x18] sm:$0xff]
    %v512 = vld [vmem:[%s10] sm:$0x1]
    %v514 = vlaneseq
    %v515 = vshrl.u32 %v514, 7
    %v516 = vsub.s32 0, %v515
    %v517 = vrot.slane %v512, %v516
    %vm519 = vcmask 261120
    %v521 = vsel %vm519, %v418, 0
    %523 = vmatprep.subr.mxu0 0.0
    %524 = vmatpush1.msra.mxu0 %v508
    %525 = vmatprep.subr.mxu0 0.0
    %526 = vmatpush1.msra.mxu0 %v509
    %527 = vmatprep.subr.mxu0 0.0
    %528 = vmatpush1.msra.mxu0 %v510
    %529 = vmatprep.subr.mxu0 0.0
    %530 = vmatpush1.msra.mxu0 %v511
    %531 = vmatprep.subr.mxu0 0.0
    %532 = vmatpush1.msra.mxu0 0.0
    %533 = vmatprep.subr.mxu0 0.0
    %534 = vmatpush1.msra.mxu0 0.0
    %535 = vmatprep.subr.mxu0 0.0
    %536 = vmatpush1.msra.mxu0 0.0
    %537 = vmatprep.subr.mxu0 0.0
    %538 = vmatpush1.msra.mxu0 0.0
    %539 = vmatprep.subr.mxu0 0.0
    %540 = vmatpush1.msra.mxu0 0.0
    %541 = vmatprep.subr.mxu0 0.0
    %542 = vmatpush1.msra.mxu0 0.0
    %543 = vmatprep.subr.mxu0 0.0
    %544 = vmatpush1.msra.mxu0 0.0
    %545 = vmatprep.subr.mxu0 0.0
    %546 = vmatpush1.msra.mxu0 0.0
    %547 = vmatprep.subr.mxu0 0.0
    %548 = vmatpush1.msra.mxu0 0.0
    %549 = vmatprep.subr.mxu0 0.0
    %550 = vmatpush1.msra.mxu0 0.0
    %551 = vmatprep.subr.mxu0 0.0
    %552 = vmatpush1.msra.mxu0 0.0
    %553 = vmatprep.subr.mxu0 0.0
    %554 = vmatpush1.msra.mxu0 0.0
    %555 = vmatprep.subr.mxu0 0.0
    %556 = vmatpush1.msra.mxu0 0.0
    %557 = vmatprep.subr.mxu0 0.0
    %558 = vmatpush1.msra.mxu0 0.0
    %559 = vmatprep.subr.mxu0 0.0
    %560 = vmatpush1.msra.mxu0 0.0
    %561 = vmatprep.subr.mxu0 0.0
    %562 = vmatpush1.msra.mxu0 0.0
    %563 = vmatprep.subr.mxu0 0.0
    %564 = vmatpush1.msra.mxu0 0.0
    %565 = vmatprep.subr.mxu0 0.0
    %566 = vmatpush1.msra.mxu0 0.0
    %567 = vmatprep.subr.mxu0 0.0
    %568 = vmatpush1.msra.mxu0 0.0
    %569 = vmatprep.subr.mxu0 0.0
    %570 = vmatpush1.msra.mxu0 0.0
    %571 = vmatprep.subr.mxu0 0.0
    %572 = vmatpush1.msra.mxu0 0.0
    %573 = vmatprep.subr.mxu0 0.0
    %574 = vmatpush1.msra.mxu0 0.0
    %575 = vmatprep.subr.mxu0 0.0
    %576 = vmatpush1.msra.mxu0 0.0
    %577 = vmatprep.subr.mxu0 0.0
    %578 = vmatpush1.msra.mxu0 0.0
    %579 = vmatprep.subr.mxu0 0.0
    %580 = vmatpush1.msra.mxu0 0.0
    %581 = vmatprep.subr.mxu0 0.0
    %582 = vmatpush1.msra.mxu0 0.0
    %583 = vmatprep.subr.mxu0 0.0
    %584 = vmatpush1.msra.mxu0 0.0
    %585 = vmatprep.subr.mxu0 0.0
    %586 = vmatpush1.msra.mxu0 0.0
    %587 = vmatprep.mubr.f32.mxu0 0.0
    %588 = vmatmul.mubr.f32.gmra.mrb[0].mxu0 %v521
    %v589 = vpop.f32.mrb[0].mxu0
    %v590 = vadd.f32 %v517, %v589
    %v591 = vpop.f32.mrb[0].mxu0
    %592 = vdwg.mxu0
    %v593 = vadd.f32 %v505, %v590
    %v594 = vxor.u32 %v593, 2147483648
    %v595 = vmul.f32 %v594, 1.442695
    %v596 = vpow.pop %v595
    %v597 = vadd.f32 %v596, 1.0
    %v598 = vrcp.pop %v597
    %v599 = vmul.f32 1.0, %v598
    %601 = vrot.lane.b32.xlu0 %v590, 64
    %v602 = vpop.permute.xlu0 %601
    %v604 = vmul.f32 %v599, %v602
    %606 = vrot.lane.b32.xlu0 %v604, 64
    %v607 = vpop.permute.xlu0 %606
    %v609 = vadd.f32 %v505, %v607
    %v610 = vtanh.pop %v609
    %v611 = vsub.f32 1.0, %v599
    %613 = vrot.lane.b32.xlu0 %v610, 96
    %v614 = vpop.permute.xlu0 %613
    %v616 = vmul.f32 %v611, %v614
    %617 = vrot.lane.b32.xlu0 %v418, 32
    %v618 = vpop.permute.xlu0 %617
    %v620 = vmul.f32 %v599, %v618
    %v621 = vadd.f32 %v616, %v620
    %623 = vrot.lane.b32.xlu0 %v621, 96
    %v624 = vpop.permute.xlu0 %623
    %626 = vst.msk [vmem:[#allocation14] sm:$0xff] %vm519, %v624
    %v627 = vld [vmem:[#allocation10] sm:$0xff]
    %v628 = vld [vmem:[#allocation10 + $0x8] sm:$0xff]
    %v629 = vld [vmem:[#allocation10 + $0x10] sm:$0xff]
    %v630 = vld [vmem:[#allocation10 + $0x18] sm:$0xff]
    %v631 = vld [vmem:[%s12] sm:$0x1]
    %v633 = vlaneseq
    %v634 = vshrl.u32 %v633, 7
    %v635 = vsub.s32 0, %v634
    %v636 = vrot.slane %v631, %v635
    %v638 = vsel %vm519, %v624, 0
    %640 = vmatprep.subr.mxu0 0.0
    %641 = vmatpush1.msra.mxu0 %v627
    %642 = vmatprep.subr.mxu0 0.0
    %643 = vmatpush1.msra.mxu0 %v628
    %644 = vmatprep.subr.mxu0 0.0
    %645 = vmatpush1.msra.mxu0 %v629
    %646 = vmatprep.subr.mxu0 0.0
    %647 = vmatpush1.msra.mxu0 %v630
    %648 = vmatprep.subr.mxu0 0.0
    %649 = vmatpush1.msra.mxu0 0.0
    %650 = vmatprep.subr.mxu0 0.0
    %651 = vmatpush1.msra.mxu0 0.0
    %652 = vmatprep.subr.mxu0 0.0
    %653 = vmatpush1.msra.mxu0 0.0
    %654 = vmatprep.subr.mxu0 0.0
    %655 = vmatpush1.msra.mxu0 0.0
    %656 = vmatprep.subr.mxu0 0.0
    %657 = vmatpush1.msra.mxu0 0.0
    %658 = vmatprep.subr.mxu0 0.0
    %659 = vmatpush1.msra.mxu0 0.0
    %660 = vmatprep.subr.mxu0 0.0
    %661 = vmatpush1.msra.mxu0 0.0
    %662 = vmatprep.subr.mxu0 0.0
    %663 = vmatpush1.msra.mxu0 0.0
    %664 = vmatprep.subr.mxu0 0.0
    %665 = vmatpush1.msra.mxu0 0.0
    %666 = vmatprep.subr.mxu0 0.0
    %667 = vmatpush1.msra.mxu0 0.0
    %668 = vmatprep.subr.mxu0 0.0
    %669 = vmatpush1.msra.mxu0 0.0
    %670 = vmatprep.subr.mxu0 0.0
    %671 = vmatpush1.msra.mxu0 0.0
    %672 = vmatprep.subr.mxu0 0.0
    %673 = vmatpush1.msra.mxu0 0.0
    %674 = vmatprep.subr.mxu0 0.0
    %675 = vmatpush1.msra.mxu0 0.0
    %676 = vmatprep.subr.mxu0 0.0
    %677 = vmatpush1.msra.mxu0 0.0
    %678 = vmatprep.subr.mxu0 0.0
    %679 = vmatpush1.msra.mxu0 0.0
    %680 = vmatprep.subr.mxu0 0.0
    %681 = vmatpush1.msra.mxu0 0.0
    %682 = vmatprep.subr.mxu0 0.0
    %683 = vmatpush1.msra.mxu0 0.0
    %684 = vmatprep.subr.mxu0 0.0
    %685 = vmatpush1.msra.mxu0 0.0
    %686 = vmatprep.subr.mxu0 0.0
    %687 = vmatpush1.msra.mxu0 0.0
    %688 = vmatprep.subr.mxu0 0.0
    %689 = vmatpush1.msra.mxu0 0.0
    %690 = vmatprep.subr.mxu0 0.0
    %691 = vmatpush1.msra.mxu0 0.0
    %692 = vmatprep.subr.mxu0 0.0
    %693 = vmatpush1.msra.mxu0 0.0
    %694 = vmatprep.subr.mxu0 0.0
    %695 = vmatpush1.msra.mxu0 0.0
    %696 = vmatprep.subr.mxu0 0.0
    %697 = vmatpush1.msra.mxu0 0.0
    %698 = vmatprep.subr.mxu0 0.0
    %699 = vmatpush1.msra.mxu0 0.0
    %700 = vmatprep.subr.mxu0 0.0
    %701 = vmatpush1.msra.mxu0 0.0
    %702 = vmatprep.subr.mxu0 0.0
    %703 = vmatpush1.msra.mxu0 0.0
    %704 = vmatprep.mubr.f32.mxu0 0.0
    %705 = vmatmul.mubr.f32.gmra.mrb[0].mxu0 %v638
    %v706 = vpop.f32.mrb[0].mxu0
    %v707 = vadd.f32 %v636, %v706
    %v708 = vpop.f32.mrb[0].mxu0
    %709 = vdwg.mxu0
    %v710 = vmax.f32 %v707, 0.0
    %712 = vrot.lane.b32.xlu0 %v710, 32
    %v713 = vpop.permute.xlu0 %712
    %v715 = vadd.f32 %v621, %v713
    %717 = vrot.lane.b32.xlu0 %v329, 32
    %v718 = vpop.permute.xlu0 %717
    %v720 = vmul.f32 %v715, %v718
    %v721 = vld [vmem:[#allocation11] sm:$0xff]
    %v722 = vld [vmem:[#allocation11 + $0x8] sm:$0xff]
    %v723 = vld [vmem:[#allocation11 + $0x10] sm:$0xff]
    %v724 = vld [vmem:[#allocation11 + $0x18] sm:$0xff]
    %v725 = vld [vmem:[%s14] sm:$0x1]
    %v727 = vlaneseq
    %v728 = vshrl.u32 %v727, 7
    %v729 = vsub.s32 0, %v728
    %v730 = vrot.slane %v725, %v729
    %733 = vrot.lane.b32.xlu0 %v720, 96
    %v734 = vpop.permute.xlu0 %733
    %v735 = vsel %vm519, %v734, 0
    %737 = vmatprep.subr.mxu0 0.0
    %738 = vmatpush1.msra.mxu0 %v721
    %739 = vmatprep.subr.mxu0 0.0
    %740 = vmatpush1.msra.mxu0 %v722
    %741 = vmatprep.subr.mxu0 0.0
    %742 = vmatpush1.msra.mxu0 %v723
    %743 = vmatprep.subr.mxu0 0.0
    %744 = vmatpush1.msra.mxu0 %v724
    %745 = vmatprep.subr.mxu0 0.0
    %746 = vmatpush1.msra.mxu0 0.0
    %747 = vmatprep.subr.mxu0 0.0
    %748 = vmatpush1.msra.mxu0 0.0
    %749 = vmatprep.subr.mxu0 0.0
    %750 = vmatpush1.msra.mxu0 0.0
    %751 = vmatprep.subr.mxu0 0.0
    %752 = vmatpush1.msra.mxu0 0.0
    %753 = vmatprep.subr.mxu0 0.0
    %754 = vmatpush1.msra.mxu0 0.0
    %755 = vmatprep.subr.mxu0 0.0
    %756 = vmatpush1.msra.mxu0 0.0
    %757 = vmatprep.subr.mxu0 0.0
    %758 = vmatpush1.msra.mxu0 0.0
    %759 = vmatprep.subr.mxu0 0.0
    %760 = vmatpush1.msra.mxu0 0.0
    %761 = vmatprep.subr.mxu0 0.0
    %762 = vmatpush1.msra.mxu0 0.0
    %763 = vmatprep.subr.mxu0 0.0
    %764 = vmatpush1.msra.mxu0 0.0
    %765 = vmatprep.subr.mxu0 0.0
    %766 = vmatpush1.msra.mxu0 0.0
    %767 = vmatprep.subr.mxu0 0.0
    %768 = vmatpush1.msra.mxu0 0.0
    %769 = vmatprep.subr.mxu0 0.0
    %770 = vmatpush1.msra.mxu0 0.0
    %771 = vmatprep.subr.mxu0 0.0
    %772 = vmatpush1.msra.mxu0 0.0
    %773 = vmatprep.subr.mxu0 0.0
    %774 = vmatpush1.msra.mxu0 0.0
    %775 = vmatprep.subr.mxu0 0.0
    %776 = vmatpush1.msra.mxu0 0.0
    %777 = vmatprep.subr.mxu0 0.0
    %778 = vmatpush1.msra.mxu0 0.0
    %779 = vmatprep.subr.mxu0 0.0
    %780 = vmatpush1.msra.mxu0 0.0
    %781 = vmatprep.subr.mxu0 0.0
    %782 = vmatpush1.msra.mxu0 0.0
    %783 = vmatprep.subr.mxu0 0.0
    %784 = vmatpush1.msra.mxu0 0.0
    %785 = vmatprep.subr.mxu0 0.0
    %786 = vmatpush1.msra.mxu0 0.0
    %787 = vmatprep.subr.mxu0 0.0
    %788 = vmatpush1.msra.mxu0 0.0
    %789 = vmatprep.subr.mxu0 0.0
    %790 = vmatpush1.msra.mxu0 0.0
    %791 = vmatprep.subr.mxu0 0.0
    %792 = vmatpush1.msra.mxu0 0.0
    %793 = vmatprep.subr.mxu0 0.0
    %794 = vmatpush1.msra.mxu0 0.0
    %795 = vmatprep.subr.mxu0 0.0
    %796 = vmatpush1.msra.mxu0 0.0
    %797 = vmatprep.subr.mxu0 0.0
    %798 = vmatpush1.msra.mxu0 0.0
    %799 = vmatprep.subr.mxu0 0.0
    %800 = vmatpush1.msra.mxu0 0.0
    %801 = vmatprep.mubr.f32.mxu0 0.0
    %802 = vmatmul.mubr.f32.gmra.mrb[0].mxu0 %v735
    %v803 = vpop.f32.mrb[0].mxu0
    %v804 = vadd.f32 %v730, %v803
    %v805 = vpop.f32.mrb[0].mxu0
    %806 = vdwg.mxu0
    %807 = vst [vmem:[#allocation13] sm:$0xff] %v804
    // Predicated region
    $region86: #{tpu_custom_call.1} parent=1 // pred_check
      _
    $region87: #{tpu_custom_call.1} parent=1 // pred_check_branch
      %809 = sbr.rel (0) target = $region89
    $region88: #{tpu_custom_call.1} parent=1 // pred_region
      %s811 = ssub.s32 128, 128
      %812 = vsyncadd [#allocation4], %s811
      %s814 = sshll.u32 [#allocation13], 4
      %s815 = int_to_ptr.vmem [resolvable:$true] %s814
      %817 = dma.vmem_to_hbm [thread:$0]  %s815, 128, %s15, [#allocation4]
    $region89: #{tpu_custom_call.1} parent=1 // pred_fallthru
      _
    // Predicated region
    $region90: #{tpu_custom_call.1} parent=1 // pred_check
      _
    $region91: #{tpu_custom_call.1} parent=1 // pred_check_branch
      %819 = sbr.rel (0) target = $region93
    $region92: #{tpu_custom_call.1} parent=1 // pred_region
      %s821 = ssub.s32 128, 128
      %822 = vsyncadd [#allocation15], %s821
      %s824 = sshll.u32 [#allocation14], 4
      %s825 = int_to_ptr.vmem [resolvable:$true] %s824
      %827 = dma.vmem_to_hbm [thread:$0]  %s825, 128, %s16, [#allocation15]
    $region93: #{tpu_custom_call.1} parent=1 // pred_fallthru
      _
    // Predicated region
    $region94: #{tpu_custom_call.1} parent=1 // pred_check
      _
    $region95: #{tpu_custom_call.1} parent=1 // pred_check_branch
      %829 = sbr.rel (0) target = $region97
    $region96: #{tpu_custom_call.1} parent=1 // pred_region
      %830 = dma.done [#allocation4], 128
    $region97: #{tpu_custom_call.1} parent=1 // pred_fallthru
      _
    // Predicated region
    $region98: #{tpu_custom_call.1} parent=1 // pred_check
      _
    $region99: #{tpu_custom_call.1} parent=1 // pred_check_branch
      %832 = sbr.rel (0) target = $region101
    $region100: #{tpu_custom_call.1} parent=1 // pred_region
      %833 = dma.done [#allocation15], 128
    $region101: #{tpu_custom_call.1} parent=1 // pred_fallthru
      _
    %834 = vsyncpa [#allocation3], 1
    %835 = vsyncpa [#allocation6], 1
    %836 = vsyncpa [#allocation9], 1
    %837 = vsyncpa [#allocation12], 1
    %838 = vsyncpa [#allocation4], 1
    %839 = vsyncpa [#allocation15], 1

</llo_original>
